<compile_context>
chip_gen: v7x
topology: tpu7x:2x2x1
jax: 0.10.0
libtpu: 0.0.40
codegen_flags: <defaults>
</compile_context>

<pallas_src>
import functools

import numpy as np
import jax
import jax.numpy as jnp
from jax import lax
from jax.experimental import pallas as pl
from jax.experimental.pallas import tpu as pltpu

BN_EPS = 1e-5

# static offsets into the packed parameter vector (see cnn_buffer_forward)
_W1, _B1, _G1, _BE1 = 0, 12, 15, 18
_W2, _B2, _G2, _BE2 = 21, 45, 47, 49
_NPARAMS = 51


def _make_kernel(n_batch, height, width):
    """Build the kernel closure for static (N, H, W)."""
    H, W = height, width
    L1 = H * W - (W + 1)                    # conv1 slab length (flat lanes)
    L1p = L1 - (W + 1)                      # pooled (sparse) slab length
    L2 = L1p - (2 * W + 2)                  # conv2 slab length
    hp, wp = (H - 1) // 2, (W - 1) // 2     # pooled spatial dims
    h2, w2o = hp - 1, wp - 1                # conv2 spatial dims
    M2 = h2 * w2o                           # flattened features per channel
    cnt1 = float(n_batch * (H - 1) * (W - 1))
    cnt2 = float(n_batch * M2)
    off1 = (0, 1, W, W + 1)                 # conv1 / maxpool lane offsets
    off2 = (0, 2, 2 * W, 2 * W + 2)         # conv2 lane offsets (sparse layout)

    def kernel(x_ref, pk_ref, m1_ref, g_ref, out_ref):
        x = x_ref[...]                      # (N, H*W) — spatial flattened on lanes
        m1 = m1_ref[...]                    # (1, L1)  — validity mask for conv1 out
        gmat = g_ref[...]                   # (L2, M2) — 0/1 sparse->dense gather

        # hoisted lane-shifted input slabs, shared by all 3 conv1 channels
        xs = [x[:, k:k + L1] for k in off1]

        pooled = []
        for c in range(3):
            # ---- conv1 (1 -> 3), 2x2 valid: 4 scalar * shifted-slab MACs ----
            acc = xs[0] * pk_ref[_W1 + 4 * c]
            for t in range(1, 4):
                acc = acc + xs[t] * pk_ref[_W1 + 4 * c + t]
            acc = acc + pk_ref[_B1 + c]
            # ---- BatchNorm (batch stats, two-pass, masked) + ReLU ----
            mean = jnp.sum(acc * m1) / cnt1
            d = (acc - mean) * m1
            var = jnp.sum(d * d) / cnt1
            scale = pk_ref[_G1 + c] * lax.rsqrt(var + BN_EPS)
            shift = pk_ref[_BE1 + c] - mean * scale
            y = jnp.maximum(acc * scale + shift, 0.0)
            # ---- 2x2 / stride-2 max pool: max of 4 shifted copies, kept
            #      sparse at lanes 2*W*i + 2*j (no compaction needed) ----
            p = jnp.maximum(jnp.maximum(y[:, 0:L1p], y[:, 1:1 + L1p]),
                            jnp.maximum(y[:, W:W + L1p], y[:, W + 1:W + 1 + L1p]))
            pooled.append(p)

        # ---- conv2 (3 -> 2), 2x2 valid on the sparse pooled layout ----
        acc2 = [None, None]
        for ci in range(3):
            # shifted slabs hoisted across both output channels
            ps = [pooled[ci][:, k:k + L2] for k in off2]
            for co in range(2):
                part = ps[0] * pk_ref[_W2 + 12 * co + 4 * ci]
                for t in range(1, 4):
                    part = part + ps[t] * pk_ref[_W2 + 12 * co + 4 * ci + t]
                acc2[co] = part if acc2[co] is None else acc2[co] + part

        for co in range(2):
            # gather the M2 valid conv2 outputs into a dense (N, M2) block
            # (single tiny 0/1 select matmul per channel — only MXU use).
            dense = jnp.dot(acc2[co], gmat, preferred_element_type=jnp.float32)
            dense = dense + pk_ref[_B2 + co]
            # ---- BatchNorm (batch stats, two-pass) + ReLU, lane-dense write ----
            mean = jnp.sum(dense) / cnt2
            d = dense - mean
            var = jnp.sum(d * d) / cnt2
            scale = pk_ref[_G2 + co] * lax.rsqrt(var + BN_EPS)
            shift = pk_ref[_BE2 + co] - mean * scale
            out_ref[:, co * M2:(co + 1) * M2] = jnp.maximum(dense * scale + shift, 0.0)

    return kernel, L1, L2, M2, w2o


@functools.partial(jax.jit, static_argnums=(2, 3))
def cnn_buffer_forward(x, params, buffer_size, observation_size):
    """Wrapper: single pallas_call; output is already flattened (no post-reshape)."""
    w1, b1, g1, be1, w2, b2, g2, be2 = params
    H, W = buffer_size, observation_size
    xf = x.reshape(-1, H * W).astype(jnp.float32)      # trivial row-major reshape
    N = xf.shape[0]

    kernel, L1, L2, M2, w2o = _make_kernel(N, H, W)

    # one packed f32 SMEM parameter vector (single DMA instead of eight)
    pk = jnp.concatenate([w1.reshape(-1), b1, g1, be1,
                          w2.reshape(-1), b2, g2, be2]).astype(jnp.float32)

    # trace-time constants (fold under jit): conv1 validity mask and the
    # sparse-conv2-output -> flattened-feature 0/1 gather matrix.
    col = np.arange(L1)
    mask1 = ((col % W) != (W - 1)).astype(np.float32)[None, :]            # (1, L1)
    q = np.arange(L2)[:, None]
    m = np.arange(M2)[None, :]
    gmat = (q == 2 * W * (m // w2o) + 2 * (m % w2o)).astype(np.float32)   # (L2, M2)

    vmem = pl.BlockSpec(memory_space=pltpu.MemorySpace.VMEM)
    smem = pl.BlockSpec(memory_space=pltpu.MemorySpace.SMEM)

    out = pl.pallas_call(
        kernel,
        out_shape=jax.ShapeDtypeStruct((N, 2 * M2), jnp.float32),
        in_specs=[vmem, smem, vmem, vmem],
        out_specs=vmem,
    )(xf, pk, jnp.asarray(mask1), jnp.asarray(gmat))

    if N == 1:
        return out.reshape(-1)
    return out                                          # already (N, 2*h2*w2)


def cnn_buffer_reference(x, params, buffer_size, observation_size):
    """Pure-JAX reference (training-mode BatchNorm, two-pass variance)."""
    w1, b1, g1, be1, w2, b2, g2, be2 = params
    y = x.reshape(-1, 1, buffer_size, observation_size).astype(jnp.float32)
    dn = ('NCHW', 'OIHW', 'NCHW')

    def bn(v, gamma, beta):
        mean = jnp.mean(v, axis=(0, 2, 3), keepdims=True)
        var = jnp.mean(jnp.square(v - mean), axis=(0, 2, 3), keepdims=True)
        gg = gamma.reshape(1, -1, 1, 1)
        bb = beta.reshape(1, -1, 1, 1)
        return (v - mean) * lax.rsqrt(var + BN_EPS) * gg + bb

    y = lax.conv_general_dilated(y, w1, (1, 1), 'VALID', dimension_numbers=dn)
    y = y + b1.reshape(1, -1, 1, 1)
    y = jnp.maximum(bn(y, g1, be1), 0.0)
    y = lax.reduce_window(y, -jnp.inf, lax.max, (1, 1, 2, 2), (1, 1, 2, 2), 'VALID')
    y = lax.conv_general_dilated(y, w2, (1, 1), 'VALID', dimension_numbers=dn)
    y = y + b2.reshape(1, -1, 1, 1)
    y = jnp.maximum(bn(y, g2, be2), 0.0)
    if y.shape[0] == 1:
        return y.reshape(-1)
    return y.reshape(y.shape[0], -1)


def make_params(key):
    """Deterministic synthetic parameters matching the PyTorch module shapes."""
    k1, k2, k3, k4 = jax.random.split(key, 4)
    w1 = jax.random.normal(k1, (3, 1, 2, 2), jnp.float32) * 0.5   # Conv2d(1,3,2)
    b1 = jax.random.normal(k2, (3,), jnp.float32) * 0.1
    w2 = jax.random.normal(k3, (2, 3, 2, 2), jnp.float32) * 0.5   # Conv2d(3,2,2)
    b2 = jax.random.normal(k4, (2,), jnp.float32) * 0.1
    g1 = jnp.ones((3,), jnp.float32)     # BatchNorm2d defaults: weight=1, bias=0
    be1 = jnp.zeros((3,), jnp.float32)
    g2 = jnp.ones((2,), jnp.float32)
    be2 = jnp.zeros((2,), jnp.float32)
    return (w1, b1, g1, be1, w2, b2, g2, be2)


if __name__ == "__main__":
    buffer_size = 16        # cfg.network.buffer.size
    observation_size = 16   # cfg.env.num_sensors
    batch = 2

    key = jax.random.PRNGKey(0)
    kx, kp = jax.random.split(key)
    x = jax.random.normal(kx, (batch, buffer_size * observation_size), jnp.float32)
    params = make_params(kp)

    out = cnn_buffer_forward(x, params, buffer_size, observation_size)
    out = jax.block_until_ready(out)

    ref = cnn_buffer_reference(x, params, buffer_size, observation_size)
    ref = jax.block_until_ready(ref)

    assert out.shape == ref.shape, (out.shape, ref.shape)
    assert jnp.allclose(out, ref, rtol=2e-4, atol=1e-4), \
        float(jnp.max(jnp.abs(out - ref)))

    print("KERNEL_OK")
</pallas_src>

<mosaic_0001>
module attributes {stable_mosaic.version = 11 : i64} {
  func.func @kernel(%arg0: memref<2x256xf32, #tpu.memory_space<vmem>>, %arg1: memref<51xf32, #tpu.memory_space<smem>>, %arg2: memref<1x239xf32, #tpu.memory_space<vmem>>, %arg3: memref<188x36xf32, #tpu.memory_space<vmem>>, %arg4: memref<2x72xf32, #tpu.memory_space<vmem>>) attributes {dimension_semantics = [], scalar_prefetch = 0 : i64, scratch_operands = 0 : i64, tpu.core_type = #tpu.core_type<tc>} {
    %c0 = arith.constant 0 : index
    %c0_0 = arith.constant 0 : index
    %0 = vector.load %arg0[%c0, %c0_0] : memref<2x256xf32, #tpu.memory_space<vmem>>, vector<2x256xf32>
    %c0_1 = arith.constant 0 : index
    %c0_2 = arith.constant 0 : index
    %1 = vector.load %arg2[%c0_1, %c0_2] : memref<1x239xf32, #tpu.memory_space<vmem>>, vector<1x239xf32>
    %c0_3 = arith.constant 0 : index
    %c0_4 = arith.constant 0 : index
    %2 = vector.load %arg3[%c0_3, %c0_4] : memref<188x36xf32, #tpu.memory_space<vmem>>, vector<188x36xf32>
    %3 = vector.extract_strided_slice %0 {offsets = [0, 0], sizes = [2, 239], strides = [1, 1]} : vector<2x256xf32> to vector<2x239xf32>
    %4 = vector.extract_strided_slice %0 {offsets = [0, 1], sizes = [2, 239], strides = [1, 1]} : vector<2x256xf32> to vector<2x239xf32>
    %5 = vector.extract_strided_slice %0 {offsets = [0, 16], sizes = [2, 239], strides = [1, 1]} : vector<2x256xf32> to vector<2x239xf32>
    %6 = vector.extract_strided_slice %0 {offsets = [0, 17], sizes = [2, 239], strides = [1, 1]} : vector<2x256xf32> to vector<2x239xf32>
    %c0_5 = arith.constant 0 : index
    %7 = memref.load %arg1[%c0_5] : memref<51xf32, #tpu.memory_space<smem>>
    %8 = vector.broadcast %7 : f32 to vector<2x239xf32>
    %9 = arith.mulf %3, %8 : vector<2x239xf32>
    %c1 = arith.constant 1 : index
    %10 = memref.load %arg1[%c1] : memref<51xf32, #tpu.memory_space<smem>>
    %11 = vector.broadcast %10 : f32 to vector<2x239xf32>
    %12 = arith.mulf %4, %11 : vector<2x239xf32>
    %13 = arith.addf %9, %12 : vector<2x239xf32>
    %c2 = arith.constant 2 : index
    %14 = memref.load %arg1[%c2] : memref<51xf32, #tpu.memory_space<smem>>
    %15 = vector.broadcast %14 : f32 to vector<2x239xf32>
    %16 = arith.mulf %5, %15 : vector<2x239xf32>
    %17 = arith.addf %13, %16 : vector<2x239xf32>
    %c3 = arith.constant 3 : index
    %18 = memref.load %arg1[%c3] : memref<51xf32, #tpu.memory_space<smem>>
    %19 = vector.broadcast %18 : f32 to vector<2x239xf32>
    %20 = arith.mulf %6, %19 : vector<2x239xf32>
    %21 = arith.addf %17, %20 : vector<2x239xf32>
    %c12 = arith.constant 12 : index
    %22 = memref.load %arg1[%c12] : memref<51xf32, #tpu.memory_space<smem>>
    %23 = vector.broadcast %22 : f32 to vector<2x239xf32>
    %24 = arith.addf %21, %23 : vector<2x239xf32>
    %25 = vector.broadcast %1 : vector<1x239xf32> to vector<2x239xf32>
    %26 = arith.mulf %24, %25 : vector<2x239xf32>
    %27 = vector.shape_cast %26 : vector<2x239xf32> to vector<1x2x239xf32>
    %cst = arith.constant dense<0.000000e+00> : vector<1xf32>
    %28 = vector.multi_reduction <add>, %27, %cst [1, 2] : vector<1x2x239xf32> to vector<1xf32>
    %29 = vector.shape_cast %28 : vector<1xf32> to vector<1x1x1xf32>
    %30 = vector.extract %29[0, 0, 0] : f32 from vector<1x1x1xf32>
    %cst_6 = arith.constant 4.500000e+02 : f32
    %31 = arith.divf %30, %cst_6 : f32
    %32 = vector.broadcast %31 : f32 to vector<2x239xf32>
    %33 = arith.subf %24, %32 : vector<2x239xf32>
    %34 = vector.broadcast %1 : vector<1x239xf32> to vector<2x239xf32>
    %35 = arith.mulf %33, %34 : vector<2x239xf32>
    %36 = arith.mulf %35, %35 : vector<2x239xf32>
    %37 = vector.shape_cast %36 : vector<2x239xf32> to vector<1x2x239xf32>
    %cst_7 = arith.constant dense<0.000000e+00> : vector<1xf32>
    %38 = vector.multi_reduction <add>, %37, %cst_7 [1, 2] : vector<1x2x239xf32> to vector<1xf32>
    %39 = vector.shape_cast %38 : vector<1xf32> to vector<1x1x1xf32>
    %40 = vector.extract %39[0, 0, 0] : f32 from vector<1x1x1xf32>
    %cst_8 = arith.constant 4.500000e+02 : f32
    %41 = arith.divf %40, %cst_8 : f32
    %c15 = arith.constant 15 : index
    %42 = memref.load %arg1[%c15] : memref<51xf32, #tpu.memory_space<smem>>
    %cst_9 = arith.constant 9.99999974E-6 : f32
    %43 = arith.addf %41, %cst_9 : f32
    %44 = math.rsqrt %43 : f32
    %45 = arith.mulf %42, %44 : f32
    %c18 = arith.constant 18 : index
    %46 = memref.load %arg1[%c18] : memref<51xf32, #tpu.memory_space<smem>>
    %47 = arith.mulf %31, %45 : f32
    %48 = arith.subf %46, %47 : f32
    %49 = vector.broadcast %45 : f32 to vector<2x239xf32>
    %50 = arith.mulf %24, %49 : vector<2x239xf32>
    %51 = vector.broadcast %48 : f32 to vector<2x239xf32>
    %52 = arith.addf %50, %51 : vector<2x239xf32>
    %cst_10 = arith.constant 0.000000e+00 : f32
    %53 = vector.broadcast %cst_10 : f32 to vector<2x239xf32>
    %54 = arith.maximumf %52, %53 : vector<2x239xf32>
    %55 = vector.extract_strided_slice %54 {offsets = [0, 0], sizes = [2, 222], strides = [1, 1]} : vector<2x239xf32> to vector<2x222xf32>
    %56 = vector.extract_strided_slice %54 {offsets = [0, 1], sizes = [2, 222], strides = [1, 1]} : vector<2x239xf32> to vector<2x222xf32>
    %57 = arith.maximumf %55, %56 : vector<2x222xf32>
    %58 = vector.extract_strided_slice %54 {offsets = [0, 16], sizes = [2, 222], strides = [1, 1]} : vector<2x239xf32> to vector<2x222xf32>
    %59 = vector.extract_strided_slice %54 {offsets = [0, 17], sizes = [2, 222], strides = [1, 1]} : vector<2x239xf32> to vector<2x222xf32>
    %60 = arith.maximumf %58, %59 : vector<2x222xf32>
    %61 = arith.maximumf %57, %60 : vector<2x222xf32>
    %c4 = arith.constant 4 : index
    %62 = memref.load %arg1[%c4] : memref<51xf32, #tpu.memory_space<smem>>
    %63 = vector.broadcast %62 : f32 to vector<2x239xf32>
    %64 = arith.mulf %3, %63 : vector<2x239xf32>
    %c5 = arith.constant 5 : index
    %65 = memref.load %arg1[%c5] : memref<51xf32, #tpu.memory_space<smem>>
    %66 = vector.broadcast %65 : f32 to vector<2x239xf32>
    %67 = arith.mulf %4, %66 : vector<2x239xf32>
    %68 = arith.addf %64, %67 : vector<2x239xf32>
    %c6 = arith.constant 6 : index
    %69 = memref.load %arg1[%c6] : memref<51xf32, #tpu.memory_space<smem>>
    %70 = vector.broadcast %69 : f32 to vector<2x239xf32>
    %71 = arith.mulf %5, %70 : vector<2x239xf32>
    %72 = arith.addf %68, %71 : vector<2x239xf32>
    %c7 = arith.constant 7 : index
    %73 = memref.load %arg1[%c7] : memref<51xf32, #tpu.memory_space<smem>>
    %74 = vector.broadcast %73 : f32 to vector<2x239xf32>
    %75 = arith.mulf %6, %74 : vector<2x239xf32>
    %76 = arith.addf %72, %75 : vector<2x239xf32>
    %c13 = arith.constant 13 : index
    %77 = memref.load %arg1[%c13] : memref<51xf32, #tpu.memory_space<smem>>
    %78 = vector.broadcast %77 : f32 to vector<2x239xf32>
    %79 = arith.addf %76, %78 : vector<2x239xf32>
    %80 = vector.broadcast %1 : vector<1x239xf32> to vector<2x239xf32>
    %81 = arith.mulf %79, %80 : vector<2x239xf32>
    %82 = vector.shape_cast %81 : vector<2x239xf32> to vector<1x2x239xf32>
    %cst_11 = arith.constant dense<0.000000e+00> : vector<1xf32>
    %83 = vector.multi_reduction <add>, %82, %cst_11 [1, 2] : vector<1x2x239xf32> to vector<1xf32>
    %84 = vector.shape_cast %83 : vector<1xf32> to vector<1x1x1xf32>
    %85 = vector.extract %84[0, 0, 0] : f32 from vector<1x1x1xf32>
    %cst_12 = arith.constant 4.500000e+02 : f32
    %86 = arith.divf %85, %cst_12 : f32
    %87 = vector.broadcast %86 : f32 to vector<2x239xf32>
    %88 = arith.subf %79, %87 : vector<2x239xf32>
    %89 = vector.broadcast %1 : vector<1x239xf32> to vector<2x239xf32>
    %90 = arith.mulf %88, %89 : vector<2x239xf32>
    %91 = arith.mulf %90, %90 : vector<2x239xf32>
    %92 = vector.shape_cast %91 : vector<2x239xf32> to vector<1x2x239xf32>
    %cst_13 = arith.constant dense<0.000000e+00> : vector<1xf32>
    %93 = vector.multi_reduction <add>, %92, %cst_13 [1, 2] : vector<1x2x239xf32> to vector<1xf32>
    %94 = vector.shape_cast %93 : vector<1xf32> to vector<1x1x1xf32>
    %95 = vector.extract %94[0, 0, 0] : f32 from vector<1x1x1xf32>
    %cst_14 = arith.constant 4.500000e+02 : f32
    %96 = arith.divf %95, %cst_14 : f32
    %c16 = arith.constant 16 : index
    %97 = memref.load %arg1[%c16] : memref<51xf32, #tpu.memory_space<smem>>
    %cst_15 = arith.constant 9.99999974E-6 : f32
    %98 = arith.addf %96, %cst_15 : f32
    %99 = math.rsqrt %98 : f32
    %100 = arith.mulf %97, %99 : f32
    %c19 = arith.constant 19 : index
    %101 = memref.load %arg1[%c19] : memref<51xf32, #tpu.memory_space<smem>>
    %102 = arith.mulf %86, %100 : f32
    %103 = arith.subf %101, %102 : f32
    %104 = vector.broadcast %100 : f32 to vector<2x239xf32>
    %105 = arith.mulf %79, %104 : vector<2x239xf32>
    %106 = vector.broadcast %103 : f32 to vector<2x239xf32>
    %107 = arith.addf %105, %106 : vector<2x239xf32>
    %cst_16 = arith.constant 0.000000e+00 : f32
    %108 = vector.broadcast %cst_16 : f32 to vector<2x239xf32>
    %109 = arith.maximumf %107, %108 : vector<2x239xf32>
    %110 = vector.extract_strided_slice %109 {offsets = [0, 0], sizes = [2, 222], strides = [1, 1]} : vector<2x239xf32> to vector<2x222xf32>
    %111 = vector.extract_strided_slice %109 {offsets = [0, 1], sizes = [2, 222], strides = [1, 1]} : vector<2x239xf32> to vector<2x222xf32>
    %112 = arith.maximumf %110, %111 : vector<2x222xf32>
    %113 = vector.extract_strided_slice %109 {offsets = [0, 16], sizes = [2, 222], strides = [1, 1]} : vector<2x239xf32> to vector<2x222xf32>
    %114 = vector.extract_strided_slice %109 {offsets = [0, 17], sizes = [2, 222], strides = [1, 1]} : vector<2x239xf32> to vector<2x222xf32>
    %115 = arith.maximumf %113, %114 : vector<2x222xf32>
    %116 = arith.maximumf %112, %115 : vector<2x222xf32>
    %c8 = arith.constant 8 : index
    %117 = memref.load %arg1[%c8] : memref<51xf32, #tpu.memory_space<smem>>
    %118 = vector.broadcast %117 : f32 to vector<2x239xf32>
    %119 = arith.mulf %3, %118 : vector<2x239xf32>
    %c9 = arith.constant 9 : index
    %120 = memref.load %arg1[%c9] : memref<51xf32, #tpu.memory_space<smem>>
    %121 = vector.broadcast %120 : f32 to vector<2x239xf32>
    %122 = arith.mulf %4, %121 : vector<2x239xf32>
    %123 = arith.addf %119, %122 : vector<2x239xf32>
    %c10 = arith.constant 10 : index
    %124 = memref.load %arg1[%c10] : memref<51xf32, #tpu.memory_space<smem>>
    %125 = vector.broadcast %124 : f32 to vector<2x239xf32>
    %126 = arith.mulf %5, %125 : vector<2x239xf32>
    %127 = arith.addf %123, %126 : vector<2x239xf32>
    %c11 = arith.constant 11 : index
    %128 = memref.load %arg1[%c11] : memref<51xf32, #tpu.memory_space<smem>>
    %129 = vector.broadcast %128 : f32 to vector<2x239xf32>
    %130 = arith.mulf %6, %129 : vector<2x239xf32>
    %131 = arith.addf %127, %130 : vector<2x239xf32>
    %c14 = arith.constant 14 : index
    %132 = memref.load %arg1[%c14] : memref<51xf32, #tpu.memory_space<smem>>
    %133 = vector.broadcast %132 : f32 to vector<2x239xf32>
    %134 = arith.addf %131, %133 : vector<2x239xf32>
    %135 = vector.broadcast %1 : vector<1x239xf32> to vector<2x239xf32>
    %136 = arith.mulf %134, %135 : vector<2x239xf32>
    %137 = vector.shape_cast %136 : vector<2x239xf32> to vector<1x2x239xf32>
    %cst_17 = arith.constant dense<0.000000e+00> : vector<1xf32>
    %138 = vector.multi_reduction <add>, %137, %cst_17 [1, 2] : vector<1x2x239xf32> to vector<1xf32>
    %139 = vector.shape_cast %138 : vector<1xf32> to vector<1x1x1xf32>
    %140 = vector.extract %139[0, 0, 0] : f32 from vector<1x1x1xf32>
    %cst_18 = arith.constant 4.500000e+02 : f32
    %141 = arith.divf %140, %cst_18 : f32
    %142 = vector.broadcast %141 : f32 to vector<2x239xf32>
    %143 = arith.subf %134, %142 : vector<2x239xf32>
    %144 = vector.broadcast %1 : vector<1x239xf32> to vector<2x239xf32>
    %145 = arith.mulf %143, %144 : vector<2x239xf32>
    %146 = arith.mulf %145, %145 : vector<2x239xf32>
    %147 = vector.shape_cast %146 : vector<2x239xf32> to vector<1x2x239xf32>
    %cst_19 = arith.constant dense<0.000000e+00> : vector<1xf32>
    %148 = vector.multi_reduction <add>, %147, %cst_19 [1, 2] : vector<1x2x239xf32> to vector<1xf32>
    %149 = vector.shape_cast %148 : vector<1xf32> to vector<1x1x1xf32>
    %150 = vector.extract %149[0, 0, 0] : f32 from vector<1x1x1xf32>
    %cst_20 = arith.constant 4.500000e+02 : f32
    %151 = arith.divf %150, %cst_20 : f32
    %c17 = arith.constant 17 : index
    %152 = memref.load %arg1[%c17] : memref<51xf32, #tpu.memory_space<smem>>
    %cst_21 = arith.constant 9.99999974E-6 : f32
    %153 = arith.addf %151, %cst_21 : f32
    %154 = math.rsqrt %153 : f32
    %155 = arith.mulf %152, %154 : f32
    %c20 = arith.constant 20 : index
    %156 = memref.load %arg1[%c20] : memref<51xf32, #tpu.memory_space<smem>>
    %157 = arith.mulf %141, %155 : f32
    %158 = arith.subf %156, %157 : f32
    %159 = vector.broadcast %155 : f32 to vector<2x239xf32>
    %160 = arith.mulf %134, %159 : vector<2x239xf32>
    %161 = vector.broadcast %158 : f32 to vector<2x239xf32>
    %162 = arith.addf %160, %161 : vector<2x239xf32>
    %cst_22 = arith.constant 0.000000e+00 : f32
    %163 = vector.broadcast %cst_22 : f32 to vector<2x239xf32>
    %164 = arith.maximumf %162, %163 : vector<2x239xf32>
    %165 = vector.extract_strided_slice %164 {offsets = [0, 0], sizes = [2, 222], strides = [1, 1]} : vector<2x239xf32> to vector<2x222xf32>
    %166 = vector.extract_strided_slice %164 {offsets = [0, 1], sizes = [2, 222], strides = [1, 1]} : vector<2x239xf32> to vector<2x222xf32>
    %167 = arith.maximumf %165, %166 : vector<2x222xf32>
    %168 = vector.extract_strided_slice %164 {offsets = [0, 16], sizes = [2, 222], strides = [1, 1]} : vector<2x239xf32> to vector<2x222xf32>
    %169 = vector.extract_strided_slice %164 {offsets = [0, 17], sizes = [2, 222], strides = [1, 1]} : vector<2x239xf32> to vector<2x222xf32>
    %170 = arith.maximumf %168, %169 : vector<2x222xf32>
    %171 = arith.maximumf %167, %170 : vector<2x222xf32>
    %172 = vector.extract_strided_slice %61 {offsets = [0, 0], sizes = [2, 188], strides = [1, 1]} : vector<2x222xf32> to vector<2x188xf32>
    %173 = vector.extract_strided_slice %61 {offsets = [0, 2], sizes = [2, 188], strides = [1, 1]} : vector<2x222xf32> to vector<2x188xf32>
    %174 = vector.extract_strided_slice %61 {offsets = [0, 32], sizes = [2, 188], strides = [1, 1]} : vector<2x222xf32> to vector<2x188xf32>
    %175 = vector.extract_strided_slice %61 {offsets = [0, 34], sizes = [2, 188], strides = [1, 1]} : vector<2x222xf32> to vector<2x188xf32>
    %c21 = arith.constant 21 : index
    %176 = memref.load %arg1[%c21] : memref<51xf32, #tpu.memory_space<smem>>
    %177 = vector.broadcast %176 : f32 to vector<2x188xf32>
    %178 = arith.mulf %172, %177 : vector<2x188xf32>
    %c22 = arith.constant 22 : index
    %179 = memref.load %arg1[%c22] : memref<51xf32, #tpu.memory_space<smem>>
    %180 = vector.broadcast %179 : f32 to vector<2x188xf32>
    %181 = arith.mulf %173, %180 : vector<2x188xf32>
    %182 = arith.addf %178, %181 : vector<2x188xf32>
    %c23 = arith.constant 23 : index
    %183 = memref.load %arg1[%c23] : memref<51xf32, #tpu.memory_space<smem>>
    %184 = vector.broadcast %183 : f32 to vector<2x188xf32>
    %185 = arith.mulf %174, %184 : vector<2x188xf32>
    %186 = arith.addf %182, %185 : vector<2x188xf32>
    %c24 = arith.constant 24 : index
    %187 = memref.load %arg1[%c24] : memref<51xf32, #tpu.memory_space<smem>>
    %188 = vector.broadcast %187 : f32 to vector<2x188xf32>
    %189 = arith.mulf %175, %188 : vector<2x188xf32>
    %190 = arith.addf %186, %189 : vector<2x188xf32>
    %c33 = arith.constant 33 : index
    %191 = memref.load %arg1[%c33] : memref<51xf32, #tpu.memory_space<smem>>
    %192 = vector.broadcast %191 : f32 to vector<2x188xf32>
    %193 = arith.mulf %172, %192 : vector<2x188xf32>
    %c34 = arith.constant 34 : index
    %194 = memref.load %arg1[%c34] : memref<51xf32, #tpu.memory_space<smem>>
    %195 = vector.broadcast %194 : f32 to vector<2x188xf32>
    %196 = arith.mulf %173, %195 : vector<2x188xf32>
    %197 = arith.addf %193, %196 : vector<2x188xf32>
    %c35 = arith.constant 35 : index
    %198 = memref.load %arg1[%c35] : memref<51xf32, #tpu.memory_space<smem>>
    %199 = vector.broadcast %198 : f32 to vector<2x188xf32>
    %200 = arith.mulf %174, %199 : vector<2x188xf32>
    %201 = arith.addf %197, %200 : vector<2x188xf32>
    %c36 = arith.constant 36 : index
    %202 = memref.load %arg1[%c36] : memref<51xf32, #tpu.memory_space<smem>>
    %203 = vector.broadcast %202 : f32 to vector<2x188xf32>
    %204 = arith.mulf %175, %203 : vector<2x188xf32>
    %205 = arith.addf %201, %204 : vector<2x188xf32>
    %206 = vector.extract_strided_slice %116 {offsets = [0, 0], sizes = [2, 188], strides = [1, 1]} : vector<2x222xf32> to vector<2x188xf32>
    %207 = vector.extract_strided_slice %116 {offsets = [0, 2], sizes = [2, 188], strides = [1, 1]} : vector<2x222xf32> to vector<2x188xf32>
    %208 = vector.extract_strided_slice %116 {offsets = [0, 32], sizes = [2, 188], strides = [1, 1]} : vector<2x222xf32> to vector<2x188xf32>
    %209 = vector.extract_strided_slice %116 {offsets = [0, 34], sizes = [2, 188], strides = [1, 1]} : vector<2x222xf32> to vector<2x188xf32>
    %c25 = arith.constant 25 : index
    %210 = memref.load %arg1[%c25] : memref<51xf32, #tpu.memory_space<smem>>
    %211 = vector.broadcast %210 : f32 to vector<2x188xf32>
    %212 = arith.mulf %206, %211 : vector<2x188xf32>
    %c26 = arith.constant 26 : index
    %213 = memref.load %arg1[%c26] : memref<51xf32, #tpu.memory_space<smem>>
    %214 = vector.broadcast %213 : f32 to vector<2x188xf32>
    %215 = arith.mulf %207, %214 : vector<2x188xf32>
    %216 = arith.addf %212, %215 : vector<2x188xf32>
    %c27 = arith.constant 27 : index
    %217 = memref.load %arg1[%c27] : memref<51xf32, #tpu.memory_space<smem>>
    %218 = vector.broadcast %217 : f32 to vector<2x188xf32>
    %219 = arith.mulf %208, %218 : vector<2x188xf32>
    %220 = arith.addf %216, %219 : vector<2x188xf32>
    %c28 = arith.constant 28 : index
    %221 = memref.load %arg1[%c28] : memref<51xf32, #tpu.memory_space<smem>>
    %222 = vector.broadcast %221 : f32 to vector<2x188xf32>
    %223 = arith.mulf %209, %222 : vector<2x188xf32>
    %224 = arith.addf %220, %223 : vector<2x188xf32>
    %225 = arith.addf %190, %224 : vector<2x188xf32>
    %c37 = arith.constant 37 : index
    %226 = memref.load %arg1[%c37] : memref<51xf32, #tpu.memory_space<smem>>
    %227 = vector.broadcast %226 : f32 to vector<2x188xf32>
    %228 = arith.mulf %206, %227 : vector<2x188xf32>
    %c38 = arith.constant 38 : index
    %229 = memref.load %arg1[%c38] : memref<51xf32, #tpu.memory_space<smem>>
    %230 = vector.broadcast %229 : f32 to vector<2x188xf32>
    %231 = arith.mulf %207, %230 : vector<2x188xf32>
    %232 = arith.addf %228, %231 : vector<2x188xf32>
    %c39 = arith.constant 39 : index
    %233 = memref.load %arg1[%c39] : memref<51xf32, #tpu.memory_space<smem>>
    %234 = vector.broadcast %233 : f32 to vector<2x188xf32>
    %235 = arith.mulf %208, %234 : vector<2x188xf32>
    %236 = arith.addf %232, %235 : vector<2x188xf32>
    %c40 = arith.constant 40 : index
    %237 = memref.load %arg1[%c40] : memref<51xf32, #tpu.memory_space<smem>>
    %238 = vector.broadcast %237 : f32 to vector<2x188xf32>
    %239 = arith.mulf %209, %238 : vector<2x188xf32>
    %240 = arith.addf %236, %239 : vector<2x188xf32>
    %241 = arith.addf %205, %240 : vector<2x188xf32>
    %242 = vector.extract_strided_slice %171 {offsets = [0, 0], sizes = [2, 188], strides = [1, 1]} : vector<2x222xf32> to vector<2x188xf32>
    %243 = vector.extract_strided_slice %171 {offsets = [0, 2], sizes = [2, 188], strides = [1, 1]} : vector<2x222xf32> to vector<2x188xf32>
    %244 = vector.extract_strided_slice %171 {offsets = [0, 32], sizes = [2, 188], strides = [1, 1]} : vector<2x222xf32> to vector<2x188xf32>
    %245 = vector.extract_strided_slice %171 {offsets = [0, 34], sizes = [2, 188], strides = [1, 1]} : vector<2x222xf32> to vector<2x188xf32>
    %c29 = arith.constant 29 : index
    %246 = memref.load %arg1[%c29] : memref<51xf32, #tpu.memory_space<smem>>
    %247 = vector.broadcast %246 : f32 to vector<2x188xf32>
    %248 = arith.mulf %242, %247 : vector<2x188xf32>
    %c30 = arith.constant 30 : index
    %249 = memref.load %arg1[%c30] : memref<51xf32, #tpu.memory_space<smem>>
    %250 = vector.broadcast %249 : f32 to vector<2x188xf32>
    %251 = arith.mulf %243, %250 : vector<2x188xf32>
    %252 = arith.addf %248, %251 : vector<2x188xf32>
    %c31 = arith.constant 31 : index
    %253 = memref.load %arg1[%c31] : memref<51xf32, #tpu.memory_space<smem>>
    %254 = vector.broadcast %253 : f32 to vector<2x188xf32>
    %255 = arith.mulf %244, %254 : vector<2x188xf32>
    %256 = arith.addf %252, %255 : vector<2x188xf32>
    %c32 = arith.constant 32 : index
    %257 = memref.load %arg1[%c32] : memref<51xf32, #tpu.memory_space<smem>>
    %258 = vector.broadcast %257 : f32 to vector<2x188xf32>
    %259 = arith.mulf %245, %258 : vector<2x188xf32>
    %260 = arith.addf %256, %259 : vector<2x188xf32>
    %261 = arith.addf %225, %260 : vector<2x188xf32>
    %c41 = arith.constant 41 : index
    %262 = memref.load %arg1[%c41] : memref<51xf32, #tpu.memory_space<smem>>
    %263 = vector.broadcast %262 : f32 to vector<2x188xf32>
    %264 = arith.mulf %242, %263 : vector<2x188xf32>
    %c42 = arith.constant 42 : index
    %265 = memref.load %arg1[%c42] : memref<51xf32, #tpu.memory_space<smem>>
    %266 = vector.broadcast %265 : f32 to vector<2x188xf32>
    %267 = arith.mulf %243, %266 : vector<2x188xf32>
    %268 = arith.addf %264, %267 : vector<2x188xf32>
    %c43 = arith.constant 43 : index
    %269 = memref.load %arg1[%c43] : memref<51xf32, #tpu.memory_space<smem>>
    %270 = vector.broadcast %269 : f32 to vector<2x188xf32>
    %271 = arith.mulf %244, %270 : vector<2x188xf32>
    %272 = arith.addf %268, %271 : vector<2x188xf32>
    %c44 = arith.constant 44 : index
    %273 = memref.load %arg1[%c44] : memref<51xf32, #tpu.memory_space<smem>>
    %274 = vector.broadcast %273 : f32 to vector<2x188xf32>
    %275 = arith.mulf %245, %274 : vector<2x188xf32>
    %276 = arith.addf %272, %275 : vector<2x188xf32>
    %277 = arith.addf %241, %276 : vector<2x188xf32>
    %cst_23 = arith.constant dense<0.000000e+00> : vector<2x36xf32>
    %278 = tpu.matmul %261, %2, %cst_23 {dimension_numbers = #tpu.dot_dimension_numbers<[1], [0], [0], [1], [0, 0, 1, 1], [], []>} : vector<2x188xf32>, vector<188x36xf32>, vector<2x36xf32> -> vector<2x36xf32>
    %c45 = arith.constant 45 : index
    %279 = memref.load %arg1[%c45] : memref<51xf32, #tpu.memory_space<smem>>
    %280 = vector.broadcast %279 : f32 to vector<2x36xf32>
    %281 = arith.addf %278, %280 : vector<2x36xf32>
    %282 = vector.shape_cast %281 : vector<2x36xf32> to vector<1x2x36xf32>
    %cst_24 = arith.constant dense<0.000000e+00> : vector<1xf32>
    %283 = vector.multi_reduction <add>, %282, %cst_24 [1, 2] : vector<1x2x36xf32> to vector<1xf32>
    %284 = vector.shape_cast %283 : vector<1xf32> to vector<1x1x1xf32>
    %285 = vector.extract %284[0, 0, 0] : f32 from vector<1x1x1xf32>
    %cst_25 = arith.constant 7.200000e+01 : f32
    %286 = arith.divf %285, %cst_25 : f32
    %287 = vector.broadcast %286 : f32 to vector<2x36xf32>
    %288 = arith.subf %281, %287 : vector<2x36xf32>
    %289 = arith.mulf %288, %288 : vector<2x36xf32>
    %290 = vector.shape_cast %289 : vector<2x36xf32> to vector<1x2x36xf32>
    %cst_26 = arith.constant dense<0.000000e+00> : vector<1xf32>
    %291 = vector.multi_reduction <add>, %290, %cst_26 [1, 2] : vector<1x2x36xf32> to vector<1xf32>
    %292 = vector.shape_cast %291 : vector<1xf32> to vector<1x1x1xf32>
    %293 = vector.extract %292[0, 0, 0] : f32 from vector<1x1x1xf32>
    %cst_27 = arith.constant 7.200000e+01 : f32
    %294 = arith.divf %293, %cst_27 : f32
    %c47 = arith.constant 47 : index
    %295 = memref.load %arg1[%c47] : memref<51xf32, #tpu.memory_space<smem>>
    %cst_28 = arith.constant 9.99999974E-6 : f32
    %296 = arith.addf %294, %cst_28 : f32
    %297 = math.rsqrt %296 : f32
    %298 = arith.mulf %295, %297 : f32
    %c49 = arith.constant 49 : index
    %299 = memref.load %arg1[%c49] : memref<51xf32, #tpu.memory_space<smem>>
    %300 = arith.mulf %286, %298 : f32
    %301 = arith.subf %299, %300 : f32
    %302 = vector.broadcast %298 : f32 to vector<2x36xf32>
    %303 = arith.mulf %281, %302 : vector<2x36xf32>
    %304 = vector.broadcast %301 : f32 to vector<2x36xf32>
    %305 = arith.addf %303, %304 : vector<2x36xf32>
    %cst_29 = arith.constant 0.000000e+00 : f32
    %306 = vector.broadcast %cst_29 : f32 to vector<2x36xf32>
    %307 = arith.maximumf %305, %306 : vector<2x36xf32>
    %c0_30 = arith.constant 0 : index
    %c0_31 = arith.constant 0 : index
    %308 = vector.load %arg4[%c0_30, %c0_31] : memref<2x72xf32, #tpu.memory_space<vmem>>, vector<2x36xf32>
    tpu.vector_store %arg4[%c0_30, %c0_31], %307 {strides = array<i32>} : memref<2x72xf32, #tpu.memory_space<vmem>>, vector<2x36xf32>,
    %cst_32 = arith.constant dense<0.000000e+00> : vector<2x36xf32>
    %309 = tpu.matmul %277, %2, %cst_32 {dimension_numbers = #tpu.dot_dimension_numbers<[1], [0], [0], [1], [0, 0, 1, 1], [], []>} : vector<2x188xf32>, vector<188x36xf32>, vector<2x36xf32> -> vector<2x36xf32>
    %c46 = arith.constant 46 : index
    %310 = memref.load %arg1[%c46] : memref<51xf32, #tpu.memory_space<smem>>
    %311 = vector.broadcast %310 : f32 to vector<2x36xf32>
    %312 = arith.addf %309, %311 : vector<2x36xf32>
    %313 = vector.shape_cast %312 : vector<2x36xf32> to vector<1x2x36xf32>
    %cst_33 = arith.constant dense<0.000000e+00> : vector<1xf32>
    %314 = vector.multi_reduction <add>, %313, %cst_33 [1, 2] : vector<1x2x36xf32> to vector<1xf32>
    %315 = vector.shape_cast %314 : vector<1xf32> to vector<1x1x1xf32>
    %316 = vector.extract %315[0, 0, 0] : f32 from vector<1x1x1xf32>
    %cst_34 = arith.constant 7.200000e+01 : f32
    %317 = arith.divf %316, %cst_34 : f32
    %318 = vector.broadcast %317 : f32 to vector<2x36xf32>
    %319 = arith.subf %312, %318 : vector<2x36xf32>
    %320 = arith.mulf %319, %319 : vector<2x36xf32>
    %321 = vector.shape_cast %320 : vector<2x36xf32> to vector<1x2x36xf32>
    %cst_35 = arith.constant dense<0.000000e+00> : vector<1xf32>
    %322 = vector.multi_reduction <add>, %321, %cst_35 [1, 2] : vector<1x2x36xf32> to vector<1xf32>
    %323 = vector.shape_cast %322 : vector<1xf32> to vector<1x1x1xf32>
    %324 = vector.extract %323[0, 0, 0] : f32 from vector<1x1x1xf32>
    %cst_36 = arith.constant 7.200000e+01 : f32
    %325 = arith.divf %324, %cst_36 : f32
    %c48 = arith.constant 48 : index
    %326 = memref.load %arg1[%c48] : memref<51xf32, #tpu.memory_space<smem>>
    %cst_37 = arith.constant 9.99999974E-6 : f32
    %327 = arith.addf %325, %cst_37 : f32
    %328 = math.rsqrt %327 : f32
    %329 = arith.mulf %326, %328 : f32
    %c50 = arith.constant 50 : index
    %330 = memref.load %arg1[%c50] : memref<51xf32, #tpu.memory_space<smem>>
    %331 = arith.mulf %317, %329 : f32
    %332 = arith.subf %330, %331 : f32
    %333 = vector.broadcast %329 : f32 to vector<2x36xf32>
    %334 = arith.mulf %312, %333 : vector<2x36xf32>
    %335 = vector.broadcast %332 : f32 to vector<2x36xf32>
    %336 = arith.addf %334, %335 : vector<2x36xf32>
    %cst_38 = arith.constant 0.000000e+00 : f32
    %337 = vector.broadcast %cst_38 : f32 to vector<2x36xf32>
    %338 = arith.maximumf %336, %337 : vector<2x36xf32>
    %c0_39 = arith.constant 0 : index
    %c36_40 = arith.constant 36 : index
    %339 = vector.load %arg4[%c0_39, %c36_40] : memref<2x72xf32, #tpu.memory_space<vmem>>, vector<2x36xf32>
    tpu.vector_store %arg4[%c0_39, %c36_40], %338 {strides = array<i32>} : memref<2x72xf32, #tpu.memory_space<vmem>>, vector<2x36xf32>,
    return
  }
}

</mosaic_0001>

<llo_original>
// kernel: cnn_buffer_forward.1
$region0: #{cnn_buffer_forward.1}
  #allocation0 [shape = 'u32[]', space=smem, size = 0x4, offset = 0x4, fixed_abs, tag = 'smem constant byte address 0x4 - core index']
  #allocation1 [shape = 'u32[144,128]{1,0:T(1,128)}', space=vmem, size = 0x12000, scoped, tag = 'internal scratch']
  %s0 = inlined_call_operand.vmem [shape: f32[2,256], index: 0, kind: input, shape index: {}]
  %s1 = inlined_call_operand.vmem [shape: f32[51], index: 1, kind: input, shape index: {}]
  %s2 = inlined_call_operand.vmem [shape: f32[1,239], index: 2, kind: input, shape index: {}]
  %s3 = inlined_call_operand.hbm [shape: f32[188,36], index: 3, kind: input, shape index: {}]
  %s4 = inlined_call_operand.hbm [shape: f32[2,72], index: 4, kind: output, shape index: {}]
  %s5 = sld [smem:[#allocation0]]
  $region34: #{cnn_buffer_forward.1} parent=0
    _
  %s7 = ssub.s32 1, %s5
  %s8 = scalar_select 0, %s7, %s5
  $region1: #{cnn_buffer_forward.1} parent=0
    #allocation2 [shape = 'u8[512]{0}', space=smem, size = 0x200, scoped, tag = 'input window, operand 1, single buffered']
    #allocation3 [shape = 's32[1]{0}', space=sflag, size = 0x4, scoped, tag = 'scoped memory for cnn_buffer_forward.1']
    #allocation4 [shape = 's32[1]{0}', space=sflag, size = 0x4, scoped, tag = 'scoped memory for cnn_buffer_forward.1']
    #allocation5 [shape = 's32[1]{0}', space=sflag, size = 0x4, scoped, tag = 'scoped memory for cnn_buffer_forward.1']
    #allocation6 [shape = 'u8[98304]{0}', space=vmem, size = 0x18000, scoped, tag = 'input window, operand 3, single buffered']
    #allocation7 [shape = 'u8[1024]{0}', space=vmem, size = 0x400, scoped, tag = 'output window, operand 0, single buffered']
    %9 = vsyncpa [#allocation5], 0
    %10 = vsyncpa [#allocation3], 0
    %11 = vsyncpa [#allocation4], 0
    // Predicated region
    $region2: #{cnn_buffer_forward.1} parent=1 // pred_check
      _
    $region3: #{cnn_buffer_forward.1} parent=1 // pred_check_branch
      %13 = sbr.rel (0) target = $region5
    $region4: #{cnn_buffer_forward.1} parent=1 // pred_region
      _
    $region5: #{cnn_buffer_forward.1} parent=1 // pred_fallthru
      _
    // Predicated region
    $region6: #{cnn_buffer_forward.1} parent=1 // pred_check
      _
    $region7: #{cnn_buffer_forward.1} parent=1 // pred_check_branch
      %15 = sbr.rel (0) target = $region9
    $region8: #{cnn_buffer_forward.1} parent=1 // pred_region
      %s17 = ssub.s32 16, 16
      %18 = vsyncadd [#allocation5], %s17
      %s20 = sshll.u32 %s1, 4
      %s21 = int_to_ptr.vmem [resolvable:$true] %s20
      %23 = dma.vmem_to_smem %s21, 16, [#allocation2], [#allocation5]
    $region9: #{cnn_buffer_forward.1} parent=1 // pred_fallthru
      _
    // Predicated region
    $region10: #{cnn_buffer_forward.1} parent=1 // pred_check
      _
    $region11: #{cnn_buffer_forward.1} parent=1 // pred_check_branch
      %25 = sbr.rel (0) target = $region13
    $region12: #{cnn_buffer_forward.1} parent=1 // pred_region
      _
    $region13: #{cnn_buffer_forward.1} parent=1 // pred_fallthru
      _
    // Predicated region
    $region14: #{cnn_buffer_forward.1} parent=1 // pred_check
      _
    $region15: #{cnn_buffer_forward.1} parent=1 // pred_check_branch
      %27 = sbr.rel (0) target = $region17
    $region16: #{cnn_buffer_forward.1} parent=1 // pred_region
      %s29 = ssub.s32 3072, 3072
      %30 = vsyncadd [#allocation3], %s29
      %s31 = sshll.u32 [#allocation6], 4
      %s32 = int_to_ptr.vmem [resolvable:$true] %s31
      %37 = dma.hbm_to_vmem [thread:$0]  %s3, 3072, %s32, [#allocation3], 128, 128, 8
    $region17: #{cnn_buffer_forward.1} parent=1 // pred_fallthru
      _
    // Predicated region
    $region18: #{cnn_buffer_forward.1} parent=1 // pred_check
      _
    $region19: #{cnn_buffer_forward.1} parent=1 // pred_check_branch
      %39 = sbr.rel (0) target = $region21
    $region20: #{cnn_buffer_forward.1} parent=1 // pred_region
      %40 = dma.done [#allocation5], 16
    $region21: #{cnn_buffer_forward.1} parent=1 // pred_fallthru
      _
    // Predicated region
    $region22: #{cnn_buffer_forward.1} parent=1 // pred_check
      _
    $region23: #{cnn_buffer_forward.1} parent=1 // pred_check_branch
      %42 = sbr.rel (0) target = $region25
    $region24: #{cnn_buffer_forward.1} parent=1 // pred_region
      %43 = dma.done [#allocation3], 3072
    $region25: #{cnn_buffer_forward.1} parent=1 // pred_fallthru
      _
    %44 = sfence
    %v45 = vld [vmem:[%s0] sm:$0xf]
    %v46 = vld [vmem:[%s2] sm:$0x3]
    %v47 = vld [vmem:[#allocation6] sm:$0xff]
    %v48 = vld [vmem:[#allocation6 + $0x8] sm:$0xff]
    %v49 = vld [vmem:[#allocation6 + $0x10] sm:$0xff]
    %v50 = vld [vmem:[#allocation6 + $0x18] sm:$0xff]
    %v51 = vld [vmem:[#allocation6 + $0x20] sm:$0xff]
    %v52 = vld [vmem:[#allocation6 + $0x28] sm:$0xff]
    %v53 = vld [vmem:[#allocation6 + $0x30] sm:$0xff]
    %v54 = vld [vmem:[#allocation6 + $0x38] sm:$0xff]
    %v55 = vld [vmem:[#allocation6 + $0x40] sm:$0xff]
    %v56 = vld [vmem:[#allocation6 + $0x48] sm:$0xff]
    %v57 = vld [vmem:[#allocation6 + $0x50] sm:$0xff]
    %v58 = vld [vmem:[#allocation6 + $0x58] sm:$0xff]
    %v59 = vld [vmem:[#allocation6 + $0x60] sm:$0xff]
    %v60 = vld [vmem:[#allocation6 + $0x68] sm:$0xff]
    %v61 = vld [vmem:[#allocation6 + $0x70] sm:$0xff]
    %v62 = vld [vmem:[#allocation6 + $0x78] sm:$0xff]
    %v63 = vld [vmem:[#allocation6 + $0x80] sm:$0xff]
    %v64 = vld [vmem:[#allocation6 + $0x88] sm:$0xff]
    %v65 = vld [vmem:[#allocation6 + $0x90] sm:$0xff]
    %v66 = vld [vmem:[#allocation6 + $0x98] sm:$0xff]
    %v67 = vld [vmem:[#allocation6 + $0xa0] sm:$0xff]
    %v68 = vld [vmem:[#allocation6 + $0xa8] sm:$0xff]
    %v69 = vld [vmem:[#allocation6 + $0xb0] sm:$0xff]
    %v70 = vld [vmem:[#allocation6 + $0xb8] sm:$0xf]
    %s71 = sld [smem:[#allocation2]]
    %v72 = vstv %s71
    %v73 = vmul.f32 %v45, %v72
    %s74 = sld [smem:[#allocation2 + $0x1]]
    %v75 = vstv %s74
    %v76 = vmul.f32 %v45, %v75
    %78 = vrot.lane.b32.xlu0 %v76, 127
    %v79 = vpop.permute.xlu0 %78
    %v80 = vrot.slane %v79, 2
    %vm81 = vcmask 1039360
    %v82 = vsel %vm81, %v79, %v80
    %v84 = vadd.f32 %v73, %v82
    %s85 = sld [smem:[#allocation2 + $0x2]]
    %v86 = vstv %s85
    %v87 = vmul.f32 %v45, %v86
    %89 = vrot.lane.b32.xlu0 %v87, 112
    %v90 = vpop.permute.xlu0 %89
    %v91 = vrot.slane %v90, 2
    %vm92 = vcmask 916480
    %v93 = vsel %vm92, %v90, %v91
    %v95 = vadd.f32 %v84, %v93
    %s96 = sld [smem:[#allocation2 + $0x3]]
    %v97 = vstv %s96
    %v98 = vmul.f32 %v45, %v97
    %100 = vrot.lane.b32.xlu0 %v98, 111
    %v101 = vpop.permute.xlu0 %100
    %v102 = vrot.slane %v101, 2
    %vm103 = vcmask 908288
    %v104 = vsel %vm103, %v101, %v102
    %v106 = vadd.f32 %v95, %v104
    %s107 = sld [smem:[#allocation2 + $0xc]]
    %v108 = vstv %s107
    %v109 = vadd.f32 %v106, %v108
    %v111 = vlaneseq
    %v112 = vshrl.u32 %v111, 7
    %v113 = vsub.s32 0, %v112
    %v114 = vrot.slane %v46, %v113
    %v115 = vlaneseq
    %v116 = vshrl.u32 %v115, 7
    %v117 = vsub.s32 1, %v116
    %v118 = vrot.slane %v46, %v117
    %v119 = vcombine.low %v114, %v118
    %v121 = vunpack.c.l.s4 1983009808
    %v122 = vunpack.c.0.s8 %v121
    %v123 = vlaneseq
    %v124 = vshrl.u32 %v123, 7
    %v125 = vsub.s32 %v122, %v124
    %v126 = vrot.slane %v119, %v125
    %v128 = vmul.f32 %v109, %v126
    %v131 = vunpack.c.l.s4 1983009808
    %v132 = vunpack.c.0.s8 %v131
    %v133 = vlaneseq
    %v134 = vshrl.u32 %v133, 7
    %v135 = vsub.s32 %v132, %v134
    %v136 = vrot.slane %v128, %v135
    %v137 = vcombine.high %v136, %v136
    %vm140 = vcmask 1041408
    %v141 = vsel %vm140, %v136, 0.0
    %vm142 = vcmask 902144
    %v143 = vsel %vm142, %v137, 0.0
    %v144 = vadd.f32 %v141, %v143
    %145 = vadd.xlane.f32.xlu0 %v144
    %v146 = vpop.xlane.xlu0 %145
    %v147 = vrot.slane %v146, 4
    %v148 = vadd.f32 %v146, %v147
    %v149 = vrot.slane %v148, 2
    %v150 = vadd.f32 %v148, %v149
    %v151 = vrot.slane %v150, 1
    %v152 = vadd.f32 %v150, %v151
    %s153 = vtos %v152
    %v154 = vrcp.pop 450.0
    %s155 = vtos %v154
    %s156 = smul.f32 %s153, %s155
    %v157 = vstv %s156
    %v158 = vsub.f32 %v109, %v157
    %v159 = vmul.f32 %v158, %v126
    %v160 = vmul.f32 %v159, %v159
    %v163 = vunpack.c.l.s4 1983009808
    %v164 = vunpack.c.0.s8 %v163
    %v165 = vlaneseq
    %v166 = vshrl.u32 %v165, 7
    %v167 = vsub.s32 %v164, %v166
    %v168 = vrot.slane %v160, %v167
    %v169 = vcombine.high %v168, %v168
    %v172 = vsel %vm140, %v168, 0.0
    %v173 = vsel %vm142, %v169, 0.0
    %v174 = vadd.f32 %v172, %v173
    %175 = vadd.xlane.f32.xlu0 %v174
    %v176 = vpop.xlane.xlu0 %175
    %v177 = vrot.slane %v176, 4
    %v178 = vadd.f32 %v176, %v177
    %v179 = vrot.slane %v178, 2
    %v180 = vadd.f32 %v178, %v179
    %v181 = vrot.slane %v180, 1
    %v182 = vadd.f32 %v180, %v181
    %s183 = vtos %v182
    %v184 = vrcp.pop 450.0
    %s185 = vtos %v184
    %s186 = smul.f32 %s183, %s185
    %s187 = sld [smem:[#allocation2 + $0xf]]
    %s188 = sadd.f32 %s186, 1e-05
    %v189 = vstv %s188
    %v190 = vrsqrt.pop %v189
    %s191 = vtos %v190
    %s192 = smul.f32 %s187, %s191
    %s193 = sld [smem:[#allocation2 + $0x12]]
    %s194 = smul.f32 %s156, %s192
    %s195 = ssub.f32 %s193, %s194
    %v196 = vstv %s192
    %v197 = vmul.f32 %v109, %v196
    %v198 = vstv %s195
    %v199 = vadd.f32 %v197, %v198
    %v200 = vmax.f32 %v199, 0.0
    %202 = vrot.lane.b32.xlu0 %v200, 127
    %v203 = vpop.permute.xlu0 %202
    %v204 = vrot.slane %v203, 2
    %v205 = vsel %vm81, %v203, %v204
    %v207 = vmax.f32 %v200, %v205
    %209 = vrot.lane.b32.xlu0 %v207, 112
    %v210 = vpop.permute.xlu0 %209
    %v211 = vrot.slane %v210, 2
    %v212 = vsel %vm92, %v210, %v211
    %v214 = vmax.f32 %v207, %v212
    %s215 = sld [smem:[#allocation2 + $0x4]]
    %v216 = vstv %s215
    %v217 = vmul.f32 %v45, %v216
    %s218 = sld [smem:[#allocation2 + $0x5]]
    %v219 = vstv %s218
    %v220 = vmul.f32 %v45, %v219
    %222 = vrot.lane.b32.xlu0 %v220, 127
    %v223 = vpop.permute.xlu0 %222
    %v224 = vrot.slane %v223, 2
    %v225 = vsel %vm81, %v223, %v224
    %v227 = vadd.f32 %v217, %v225
    %s228 = sld [smem:[#allocation2 + $0x6]]
    %v229 = vstv %s228
    %v230 = vmul.f32 %v45, %v229
    %232 = vrot.lane.b32.xlu0 %v230, 112
    %v233 = vpop.permute.xlu0 %232
    %v234 = vrot.slane %v233, 2
    %v235 = vsel %vm92, %v233, %v234
    %v237 = vadd.f32 %v227, %v235
    %s238 = sld [smem:[#allocation2 + $0x7]]
    %v239 = vstv %s238
    %v240 = vmul.f32 %v45, %v239
    %242 = vrot.lane.b32.xlu0 %v240, 111
    %v243 = vpop.permute.xlu0 %242
    %v244 = vrot.slane %v243, 2
    %v245 = vsel %vm103, %v243, %v244
    %v247 = vadd.f32 %v237, %v245
    %s248 = sld [smem:[#allocation2 + $0xd]]
    %v249 = vstv %s248
    %v250 = vadd.f32 %v247, %v249
    %v251 = vmul.f32 %v250, %v126
    %v254 = vunpack.c.l.s4 1983009808
    %v255 = vunpack.c.0.s8 %v254
    %v256 = vlaneseq
    %v257 = vshrl.u32 %v256, 7
    %v258 = vsub.s32 %v255, %v257
    %v259 = vrot.slane %v251, %v258
    %v260 = vcombine.high %v259, %v259
    %v263 = vsel %vm140, %v259, 0.0
    %v264 = vsel %vm142, %v260, 0.0
    %v265 = vadd.f32 %v263, %v264
    %266 = vadd.xlane.f32.xlu0 %v265
    %v267 = vpop.xlane.xlu0 %266
    %v268 = vrot.slane %v267, 4
    %v269 = vadd.f32 %v267, %v268
    %v270 = vrot.slane %v269, 2
    %v271 = vadd.f32 %v269, %v270
    %v272 = vrot.slane %v271, 1
    %v273 = vadd.f32 %v271, %v272
    %s274 = vtos %v273
    %v275 = vrcp.pop 450.0
    %s276 = vtos %v275
    %s277 = smul.f32 %s274, %s276
    %v278 = vstv %s277
    %v279 = vsub.f32 %v250, %v278
    %v280 = vmul.f32 %v279, %v126
    %v281 = vmul.f32 %v280, %v280
    %v284 = vunpack.c.l.s4 1983009808
    %v285 = vunpack.c.0.s8 %v284
    %v286 = vlaneseq
    %v287 = vshrl.u32 %v286, 7
    %v288 = vsub.s32 %v285, %v287
    %v289 = vrot.slane %v281, %v288
    %v290 = vcombine.high %v289, %v289
    %v293 = vsel %vm140, %v289, 0.0
    %v294 = vsel %vm142, %v290, 0.0
    %v295 = vadd.f32 %v293, %v294
    %296 = vadd.xlane.f32.xlu0 %v295
    %v297 = vpop.xlane.xlu0 %296
    %v298 = vrot.slane %v297, 4
    %v299 = vadd.f32 %v297, %v298
    %v300 = vrot.slane %v299, 2
    %v301 = vadd.f32 %v299, %v300
    %v302 = vrot.slane %v301, 1
    %v303 = vadd.f32 %v301, %v302
    %s304 = vtos %v303
    %v305 = vrcp.pop 450.0
    %s306 = vtos %v305
    %s307 = smul.f32 %s304, %s306
    %s308 = sld [smem:[#allocation2 + $0x10]]
    %s309 = sadd.f32 %s307, 1e-05
    %v310 = vstv %s309
    %v311 = vrsqrt.pop %v310
    %s312 = vtos %v311
    %s313 = smul.f32 %s308, %s312
    %s314 = sld [smem:[#allocation2 + $0x13]]
    %s315 = smul.f32 %s277, %s313
    %s316 = ssub.f32 %s314, %s315
    %v317 = vstv %s313
    %v318 = vmul.f32 %v250, %v317
    %v319 = vstv %s316
    %v320 = vadd.f32 %v318, %v319
    %v321 = vmax.f32 %v320, 0.0
    %323 = vrot.lane.b32.xlu0 %v321, 127
    %v324 = vpop.permute.xlu0 %323
    %v325 = vrot.slane %v324, 2
    %v326 = vsel %vm81, %v324, %v325
    %v328 = vmax.f32 %v321, %v326
    %330 = vrot.lane.b32.xlu0 %v328, 112
    %v331 = vpop.permute.xlu0 %330
    %v332 = vrot.slane %v331, 2
    %v333 = vsel %vm92, %v331, %v332
    %v335 = vmax.f32 %v328, %v333
    %s336 = sld [smem:[#allocation2 + $0x8]]
    %v337 = vstv %s336
    %v338 = vmul.f32 %v45, %v337
    %s339 = sld [smem:[#allocation2 + $0x9]]
    %v340 = vstv %s339
    %v341 = vmul.f32 %v45, %v340
    %343 = vrot.lane.b32.xlu0 %v341, 127
    %v344 = vpop.permute.xlu0 %343
    %v345 = vrot.slane %v344, 2
    %v346 = vsel %vm81, %v344, %v345
    %v348 = vadd.f32 %v338, %v346
    %s349 = sld [smem:[#allocation2 + $0xa]]
    %v350 = vstv %s349
    %v351 = vmul.f32 %v45, %v350
    %353 = vrot.lane.b32.xlu0 %v351, 112
    %v354 = vpop.permute.xlu0 %353
    %v355 = vrot.slane %v354, 2
    %v356 = vsel %vm92, %v354, %v355
    %v358 = vadd.f32 %v348, %v356
    %s359 = sld [smem:[#allocation2 + $0xb]]
    %v360 = vstv %s359
    %v361 = vmul.f32 %v45, %v360
    %363 = vrot.lane.b32.xlu0 %v361, 111
    %v364 = vpop.permute.xlu0 %363
    %v365 = vrot.slane %v364, 2
    %v366 = vsel %vm103, %v364, %v365
    %v368 = vadd.f32 %v358, %v366
    %s369 = sld [smem:[#allocation2 + $0xe]]
    %v370 = vstv %s369
    %v371 = vadd.f32 %v368, %v370
    %v372 = vmul.f32 %v371, %v126
    %v375 = vunpack.c.l.s4 1983009808
    %v376 = vunpack.c.0.s8 %v375
    %v377 = vlaneseq
    %v378 = vshrl.u32 %v377, 7
    %v379 = vsub.s32 %v376, %v378
    %v380 = vrot.slane %v372, %v379
    %v381 = vcombine.high %v380, %v380
    %v384 = vsel %vm140, %v380, 0.0
    %v385 = vsel %vm142, %v381, 0.0
    %v386 = vadd.f32 %v384, %v385
    %387 = vadd.xlane.f32.xlu0 %v386
    %v388 = vpop.xlane.xlu0 %387
    %v389 = vrot.slane %v388, 4
    %v390 = vadd.f32 %v388, %v389
    %v391 = vrot.slane %v390, 2
    %v392 = vadd.f32 %v390, %v391
    %v393 = vrot.slane %v392, 1
    %v394 = vadd.f32 %v392, %v393
    %s395 = vtos %v394
    %v396 = vrcp.pop 450.0
    %s397 = vtos %v396
    %s398 = smul.f32 %s395, %s397
    %v399 = vstv %s398
    %v400 = vsub.f32 %v371, %v399
    %v401 = vmul.f32 %v400, %v126
    %v402 = vmul.f32 %v401, %v401
    %v405 = vunpack.c.l.s4 1983009808
    %v406 = vunpack.c.0.s8 %v405
    %v407 = vlaneseq
    %v408 = vshrl.u32 %v407, 7
    %v409 = vsub.s32 %v406, %v408
    %v410 = vrot.slane %v402, %v409
    %v411 = vcombine.high %v410, %v410
    %v414 = vsel %vm140, %v410, 0.0
    %v415 = vsel %vm142, %v411, 0.0
    %v416 = vadd.f32 %v414, %v415
    %417 = vadd.xlane.f32.xlu0 %v416
    %v418 = vpop.xlane.xlu0 %417
    %v419 = vrot.slane %v418, 4
    %v420 = vadd.f32 %v418, %v419
    %v421 = vrot.slane %v420, 2
    %v422 = vadd.f32 %v420, %v421
    %v423 = vrot.slane %v422, 1
    %v424 = vadd.f32 %v422, %v423
    %s425 = vtos %v424
    %v426 = vrcp.pop 450.0
    %s427 = vtos %v426
    %s428 = smul.f32 %s425, %s427
    %s429 = sld [smem:[#allocation2 + $0x11]]
    %s430 = sadd.f32 %s428, 1e-05
    %v431 = vstv %s430
    %v432 = vrsqrt.pop %v431
    %s433 = vtos %v432
    %s434 = smul.f32 %s429, %s433
    %s435 = sld [smem:[#allocation2 + $0x14]]
    %s436 = smul.f32 %s398, %s434
    %s437 = ssub.f32 %s435, %s436
    %v438 = vstv %s434
    %v439 = vmul.f32 %v371, %v438
    %v440 = vstv %s437
    %v441 = vadd.f32 %v439, %v440
    %v442 = vmax.f32 %v441, 0.0
    %444 = vrot.lane.b32.xlu0 %v442, 127
    %v445 = vpop.permute.xlu0 %444
    %v446 = vrot.slane %v445, 2
    %v447 = vsel %vm81, %v445, %v446
    %v449 = vmax.f32 %v442, %v447
    %451 = vrot.lane.b32.xlu0 %v449, 112
    %v452 = vpop.permute.xlu0 %451
    %v453 = vrot.slane %v452, 2
    %v454 = vsel %vm92, %v452, %v453
    %v456 = vmax.f32 %v449, %v454
    %s457 = sld [smem:[#allocation2 + $0x15]]
    %v458 = vstv %s457
    %v459 = vmul.f32 %v214, %v458
    %s460 = sld [smem:[#allocation2 + $0x16]]
    %v461 = vstv %s460
    %v462 = vmul.f32 %v214, %v461
    %464 = vrot.lane.b32.xlu0 %v462, 126
    %v465 = vpop.permute.xlu0 %464
    %v466 = vrot.slane %v465, 2
    %vm467 = vcmask 1031168
    %v468 = vsel %vm467, %v465, %v466
    %v470 = vadd.f32 %v459, %v468
    %s471 = sld [smem:[#allocation2 + $0x17]]
    %v472 = vstv %s471
    %v473 = vmul.f32 %v214, %v472
    %475 = vrot.lane.b32.xlu0 %v473, 96
    %v476 = vpop.permute.xlu0 %475
    %v477 = vrot.slane %v476, 2
    %vm478 = vcmask 785408
    %v479 = vsel %vm478, %v476, %v477
    %v481 = vadd.f32 %v470, %v479
    %s482 = sld [smem:[#allocation2 + $0x18]]
    %v483 = vstv %s482
    %v484 = vmul.f32 %v214, %v483
    %486 = vrot.lane.b32.xlu0 %v484, 94
    %v487 = vpop.permute.xlu0 %486
    %v488 = vrot.slane %v487, 2
    %vm489 = vcmask 769024
    %v490 = vsel %vm489, %v487, %v488
    %v492 = vadd.f32 %v481, %v490
    %s493 = sld [smem:[#allocation2 + $0x21]]
    %v494 = vstv %s493
    %v495 = vmul.f32 %v214, %v494
    %s496 = sld [smem:[#allocation2 + $0x22]]
    %v497 = vstv %s496
    %v498 = vmul.f32 %v214, %v497
    %500 = vrot.lane.b32.xlu0 %v498, 126
    %v501 = vpop.permute.xlu0 %500
    %v502 = vrot.slane %v501, 2
    %v503 = vsel %vm467, %v501, %v502
    %v505 = vadd.f32 %v495, %v503
    %s506 = sld [smem:[#allocation2 + $0x23]]
    %v507 = vstv %s506
    %v508 = vmul.f32 %v214, %v507
    %510 = vrot.lane.b32.xlu0 %v508, 96
    %v511 = vpop.permute.xlu0 %510
    %v512 = vrot.slane %v511, 2
    %v513 = vsel %vm478, %v511, %v512
    %v515 = vadd.f32 %v505, %v513
    %s516 = sld [smem:[#allocation2 + $0x24]]
    %v517 = vstv %s516
    %v518 = vmul.f32 %v214, %v517
    %520 = vrot.lane.b32.xlu0 %v518, 94
    %v521 = vpop.permute.xlu0 %520
    %v522 = vrot.slane %v521, 2
    %v523 = vsel %vm489, %v521, %v522
    %v525 = vadd.f32 %v515, %v523
    %s526 = sld [smem:[#allocation2 + $0x19]]
    %v527 = vstv %s526
    %v528 = vmul.f32 %v335, %v527
    %s529 = sld [smem:[#allocation2 + $0x1a]]
    %v530 = vstv %s529
    %v531 = vmul.f32 %v335, %v530
    %533 = vrot.lane.b32.xlu0 %v531, 126
    %v534 = vpop.permute.xlu0 %533
    %v535 = vrot.slane %v534, 2
    %v536 = vsel %vm467, %v534, %v535
    %v538 = vadd.f32 %v528, %v536
    %s539 = sld [smem:[#allocation2 + $0x1b]]
    %v540 = vstv %s539
    %v541 = vmul.f32 %v335, %v540
    %543 = vrot.lane.b32.xlu0 %v541, 96
    %v544 = vpop.permute.xlu0 %543
    %v545 = vrot.slane %v544, 2
    %v546 = vsel %vm478, %v544, %v545
    %v548 = vadd.f32 %v538, %v546
    %s549 = sld [smem:[#allocation2 + $0x1c]]
    %v550 = vstv %s549
    %v551 = vmul.f32 %v335, %v550
    %553 = vrot.lane.b32.xlu0 %v551, 94
    %v554 = vpop.permute.xlu0 %553
    %v555 = vrot.slane %v554, 2
    %v556 = vsel %vm489, %v554, %v555
    %v558 = vadd.f32 %v548, %v556
    %v559 = vadd.f32 %v492, %v558
    %s560 = sld [smem:[#allocation2 + $0x25]]
    %v561 = vstv %s560
    %v562 = vmul.f32 %v335, %v561
    %s563 = sld [smem:[#allocation2 + $0x26]]
    %v564 = vstv %s563
    %v565 = vmul.f32 %v335, %v564
    %567 = vrot.lane.b32.xlu0 %v565, 126
    %v568 = vpop.permute.xlu0 %567
    %v569 = vrot.slane %v568, 2
    %v570 = vsel %vm467, %v568, %v569
    %v572 = vadd.f32 %v562, %v570
    %s573 = sld [smem:[#allocation2 + $0x27]]
    %v574 = vstv %s573
    %v575 = vmul.f32 %v335, %v574
    %577 = vrot.lane.b32.xlu0 %v575, 96
    %v578 = vpop.permute.xlu0 %577
    %v579 = vrot.slane %v578, 2
    %v580 = vsel %vm478, %v578, %v579
    %v582 = vadd.f32 %v572, %v580
    %s583 = sld [smem:[#allocation2 + $0x28]]
    %v584 = vstv %s583
    %v585 = vmul.f32 %v335, %v584
    %587 = vrot.lane.b32.xlu0 %v585, 94
    %v588 = vpop.permute.xlu0 %587
    %v589 = vrot.slane %v588, 2
    %v590 = vsel %vm489, %v588, %v589
    %v592 = vadd.f32 %v582, %v590
    %v593 = vadd.f32 %v525, %v592
    %s594 = sld [smem:[#allocation2 + $0x1d]]
    %v595 = vstv %s594
    %v596 = vmul.f32 %v456, %v595
    %s597 = sld [smem:[#allocation2 + $0x1e]]
    %v598 = vstv %s597
    %v599 = vmul.f32 %v456, %v598
    %601 = vrot.lane.b32.xlu0 %v599, 126
    %v602 = vpop.permute.xlu0 %601
    %v603 = vrot.slane %v602, 2
    %v604 = vsel %vm467, %v602, %v603
    %v606 = vadd.f32 %v596, %v604
    %s607 = sld [smem:[#allocation2 + $0x1f]]
    %v608 = vstv %s607
    %v609 = vmul.f32 %v456, %v608
    %611 = vrot.lane.b32.xlu0 %v609, 96
    %v612 = vpop.permute.xlu0 %611
    %v613 = vrot.slane %v612, 2
    %v614 = vsel %vm478, %v612, %v613
    %v616 = vadd.f32 %v606, %v614
    %s617 = sld [smem:[#allocation2 + $0x20]]
    %v618 = vstv %s617
    %v619 = vmul.f32 %v456, %v618
    %621 = vrot.lane.b32.xlu0 %v619, 94
    %v622 = vpop.permute.xlu0 %621
    %v623 = vrot.slane %v622, 2
    %v624 = vsel %vm489, %v622, %v623
    %v626 = vadd.f32 %v616, %v624
    %v627 = vadd.f32 %v559, %v626
    %s628 = sld [smem:[#allocation2 + $0x29]]
    %v629 = vstv %s628
    %v630 = vmul.f32 %v456, %v629
    %s631 = sld [smem:[#allocation2 + $0x2a]]
    %v632 = vstv %s631
    %v633 = vmul.f32 %v456, %v632
    %635 = vrot.lane.b32.xlu0 %v633, 126
    %v636 = vpop.permute.xlu0 %635
    %v637 = vrot.slane %v636, 2
    %v638 = vsel %vm467, %v636, %v637
    %v640 = vadd.f32 %v630, %v638
    %s641 = sld [smem:[#allocation2 + $0x2b]]
    %v642 = vstv %s641
    %v643 = vmul.f32 %v456, %v642
    %645 = vrot.lane.b32.xlu0 %v643, 96
    %v646 = vpop.permute.xlu0 %645
    %v647 = vrot.slane %v646, 2
    %v648 = vsel %vm478, %v646, %v647
    %v650 = vadd.f32 %v640, %v648
    %s651 = sld [smem:[#allocation2 + $0x2c]]
    %v652 = vstv %s651
    %v653 = vmul.f32 %v456, %v652
    %655 = vrot.lane.b32.xlu0 %v653, 94
    %v656 = vpop.permute.xlu0 %655
    %v657 = vrot.slane %v656, 2
    %v658 = vsel %vm489, %v656, %v657
    %v660 = vadd.f32 %v650, %v658
    %v661 = vadd.f32 %v593, %v660
    %s662 = sld [smem:[#allocation2 + $0x2d]]
    %v663 = vstv %s662
    %v666 = vunpack.c.l.s4 1983009808
    %v667 = vunpack.c.0.s8 %v666
    %v668 = vlaneseq
    %v669 = vshrl.u32 %v668, 7
    %v670 = vsub.s32 %v667, %v669
    %v671 = vrot.slane %v627, %v670
    %v672 = vcombine.high %v671, %v671
    %vm674 = vcmask 490496
    %v675 = vsel %vm674, %v672, 0
    %vm677 = vcmask 1043456
    %v679 = vsel %vm677, %v70, 0
    %681 = vmatprep.subr.mxu0 0.0
    %682 = vmatpush1.msra.mxu0 %v47
    %683 = vmatprep.subr.mxu0 0.0
    %684 = vmatpush1.msra.mxu0 %v48
    %685 = vmatprep.subr.mxu0 0.0
    %686 = vmatpush1.msra.mxu0 %v49
    %687 = vmatprep.subr.mxu0 0.0
    %688 = vmatpush1.msra.mxu0 %v50
    %689 = vmatprep.subr.mxu0 0.0
    %690 = vmatpush1.msra.mxu0 %v51
    %691 = vmatprep.subr.mxu0 0.0
    %692 = vmatpush1.msra.mxu0 %v52
    %693 = vmatprep.subr.mxu0 0.0
    %694 = vmatpush1.msra.mxu0 %v53
    %695 = vmatprep.subr.mxu0 0.0
    %696 = vmatpush1.msra.mxu0 %v54
    %697 = vmatprep.subr.mxu0 0.0
    %698 = vmatpush1.msra.mxu0 %v55
    %699 = vmatprep.subr.mxu0 0.0
    %700 = vmatpush1.msra.mxu0 %v56
    %701 = vmatprep.subr.mxu0 0.0
    %702 = vmatpush1.msra.mxu0 %v57
    %703 = vmatprep.subr.mxu0 0.0
    %704 = vmatpush1.msra.mxu0 %v58
    %705 = vmatprep.subr.mxu0 0.0
    %706 = vmatpush1.msra.mxu0 %v59
    %707 = vmatprep.subr.mxu0 0.0
    %708 = vmatpush1.msra.mxu0 %v60
    %709 = vmatprep.subr.mxu0 0.0
    %710 = vmatpush1.msra.mxu0 %v61
    %711 = vmatprep.subr.mxu0 0.0
    %712 = vmatpush1.msra.mxu0 %v62
    %713 = vmatprep.subr.mxu0 0.0
    %714 = vmatpush1.msra.mxu0 %v63
    %715 = vmatprep.subr.mxu0 0.0
    %716 = vmatpush1.msra.mxu0 %v64
    %717 = vmatprep.subr.mxu0 0.0
    %718 = vmatpush1.msra.mxu0 %v65
    %719 = vmatprep.subr.mxu0 0.0
    %720 = vmatpush1.msra.mxu0 %v66
    %721 = vmatprep.subr.mxu0 0.0
    %722 = vmatpush1.msra.mxu0 %v67
    %723 = vmatprep.subr.mxu0 0.0
    %724 = vmatpush1.msra.mxu0 %v68
    %725 = vmatprep.subr.mxu0 0.0
    %726 = vmatpush1.msra.mxu0 %v69
    %727 = vmatprep.subr.mxu0 0.0
    %728 = vmatpush1.msra.mxu0 %v679
    %729 = vmatprep.subr.mxu0 0.0
    %730 = vmatpush1.msra.mxu0 0.0
    %731 = vmatprep.subr.mxu0 0.0
    %732 = vmatpush1.msra.mxu0 0.0
    %733 = vmatprep.subr.mxu0 0.0
    %734 = vmatpush1.msra.mxu0 0.0
    %735 = vmatprep.subr.mxu0 0.0
    %736 = vmatpush1.msra.mxu0 0.0
    %737 = vmatprep.subr.mxu0 0.0
    %738 = vmatpush1.msra.mxu0 0.0
    %739 = vmatprep.subr.mxu0 0.0
    %740 = vmatpush1.msra.mxu0 0.0
    %741 = vmatprep.subr.mxu0 0.0
    %742 = vmatpush1.msra.mxu0 0.0
    %743 = vmatprep.subr.mxu0 0.0
    %744 = vmatpush1.msra.mxu0 0.0
    %745 = vmatprep.mubr.f32.mxu0 %v675
    %746 = vmatmul.mubr.f32.gmra.mrb[0].mxu0 %v671
    %v747 = vpop.f32.mrb[0].mxu0
    %v748 = vadd.f32 %v663, %v747
    %v749 = vpop.f32.mrb[0].mxu0
    %750 = vdwg.mxu0
    %vm751 = vcmask 287744
    %v752 = vsel %vm751, %v748, 0.0
    %753 = vadd.xlane.f32.xlu0 %v752
    %v754 = vpop.xlane.xlu0 %753
    %v755 = vrot.slane %v754, 4
    %v756 = vadd.f32 %v754, %v755
    %v757 = vrot.slane %v756, 2
    %v758 = vadd.f32 %v756, %v757
    %v759 = vrot.slane %v758, 1
    %v760 = vadd.f32 %v758, %v759
    %s761 = vtos %v760
    %v762 = vrcp.pop 72.0
    %s763 = vtos %v762
    %s764 = smul.f32 %s761, %s763
    %v765 = vstv %s764
    %v766 = vsub.f32 %v748, %v765
    %v767 = vmul.f32 %v766, %v766
    %v768 = vsel %vm751, %v767, 0.0
    %769 = vadd.xlane.f32.xlu0 %v768
    %v770 = vpop.xlane.xlu0 %769
    %v771 = vrot.slane %v770, 4
    %v772 = vadd.f32 %v770, %v771
    %v773 = vrot.slane %v772, 2
    %v774 = vadd.f32 %v772, %v773
    %v775 = vrot.slane %v774, 1
    %v776 = vadd.f32 %v774, %v775
    %s777 = vtos %v776
    %v778 = vrcp.pop 72.0
    %s779 = vtos %v778
    %s780 = smul.f32 %s777, %s779
    %s781 = sld [smem:[#allocation2 + $0x2f]]
    %s782 = sadd.f32 %s780, 1e-05
    %v783 = vstv %s782
    %v784 = vrsqrt.pop %v783
    %s785 = vtos %v784
    %s786 = smul.f32 %s781, %s785
    %s787 = sld [smem:[#allocation2 + $0x31]]
    %s788 = smul.f32 %s764, %s786
    %s789 = ssub.f32 %s787, %s788
    %v790 = vstv %s786
    %v791 = vmul.f32 %v748, %v790
    %v792 = vstv %s789
    %v793 = vadd.f32 %v791, %v792
    %v794 = vmax.f32 %v793, 0.0
    %795 = vst.msk [vmem:[#allocation7] sm:$0x3] %vm751, %v794
    %s796 = sld [smem:[#allocation2 + $0x2e]]
    %v797 = vstv %s796
    %v800 = vunpack.c.l.s4 1983009808
    %v801 = vunpack.c.0.s8 %v800
    %v802 = vlaneseq
    %v803 = vshrl.u32 %v802, 7
    %v804 = vsub.s32 %v801, %v803
    %v805 = vrot.slane %v661, %v804
    %v806 = vcombine.high %v805, %v805
    %v808 = vsel %vm674, %v806, 0
    %810 = vmatprep.subr.mxu0 0.0
    %811 = vmatpush1.msra.mxu0 %v47
    %812 = vmatprep.subr.mxu0 0.0
    %813 = vmatpush1.msra.mxu0 %v48
    %814 = vmatprep.subr.mxu0 0.0
    %815 = vmatpush1.msra.mxu0 %v49
    %816 = vmatprep.subr.mxu0 0.0
    %817 = vmatpush1.msra.mxu0 %v50
    %818 = vmatprep.subr.mxu0 0.0
    %819 = vmatpush1.msra.mxu0 %v51
    %820 = vmatprep.subr.mxu0 0.0
    %821 = vmatpush1.msra.mxu0 %v52
    %822 = vmatprep.subr.mxu0 0.0
    %823 = vmatpush1.msra.mxu0 %v53
    %824 = vmatprep.subr.mxu0 0.0
    %825 = vmatpush1.msra.mxu0 %v54
    %826 = vmatprep.subr.mxu0 0.0
    %827 = vmatpush1.msra.mxu0 %v55
    %828 = vmatprep.subr.mxu0 0.0
    %829 = vmatpush1.msra.mxu0 %v56
    %830 = vmatprep.subr.mxu0 0.0
    %831 = vmatpush1.msra.mxu0 %v57
    %832 = vmatprep.subr.mxu0 0.0
    %833 = vmatpush1.msra.mxu0 %v58
    %834 = vmatprep.subr.mxu0 0.0
    %835 = vmatpush1.msra.mxu0 %v59
    %836 = vmatprep.subr.mxu0 0.0
    %837 = vmatpush1.msra.mxu0 %v60
    %838 = vmatprep.subr.mxu0 0.0
    %839 = vmatpush1.msra.mxu0 %v61
    %840 = vmatprep.subr.mxu0 0.0
    %841 = vmatpush1.msra.mxu0 %v62
    %842 = vmatprep.subr.mxu0 0.0
    %843 = vmatpush1.msra.mxu0 %v63
    %844 = vmatprep.subr.mxu0 0.0
    %845 = vmatpush1.msra.mxu0 %v64
    %846 = vmatprep.subr.mxu0 0.0
    %847 = vmatpush1.msra.mxu0 %v65
    %848 = vmatprep.subr.mxu0 0.0
    %849 = vmatpush1.msra.mxu0 %v66
    %850 = vmatprep.subr.mxu0 0.0
    %851 = vmatpush1.msra.mxu0 %v67
    %852 = vmatprep.subr.mxu0 0.0
    %853 = vmatpush1.msra.mxu0 %v68
    %854 = vmatprep.subr.mxu0 0.0
    %855 = vmatpush1.msra.mxu0 %v69
    %856 = vmatprep.subr.mxu0 0.0
    %857 = vmatpush1.msra.mxu0 %v679
    %858 = vmatprep.subr.mxu0 0.0
    %859 = vmatpush1.msra.mxu0 0.0
    %860 = vmatprep.subr.mxu0 0.0
    %861 = vmatpush1.msra.mxu0 0.0
    %862 = vmatprep.subr.mxu0 0.0
    %863 = vmatpush1.msra.mxu0 0.0
    %864 = vmatprep.subr.mxu0 0.0
    %865 = vmatpush1.msra.mxu0 0.0
    %866 = vmatprep.subr.mxu0 0.0
    %867 = vmatpush1.msra.mxu0 0.0
    %868 = vmatprep.subr.mxu0 0.0
    %869 = vmatpush1.msra.mxu0 0.0
    %870 = vmatprep.subr.mxu0 0.0
    %871 = vmatpush1.msra.mxu0 0.0
    %872 = vmatprep.subr.mxu0 0.0
    %873 = vmatpush1.msra.mxu0 0.0
    %874 = vmatprep.mubr.f32.mxu0 %v808
    %875 = vmatmul.mubr.f32.gmra.mrb[0].mxu0 %v805
    %v876 = vpop.f32.mrb[0].mxu0
    %v877 = vadd.f32 %v797, %v876
    %v878 = vpop.f32.mrb[0].mxu0
    %879 = vdwg.mxu0
    %v880 = vsel %vm751, %v877, 0.0
    %881 = vadd.xlane.f32.xlu0 %v880
    %v882 = vpop.xlane.xlu0 %881
    %v883 = vrot.slane %v882, 4
    %v884 = vadd.f32 %v882, %v883
    %v885 = vrot.slane %v884, 2
    %v886 = vadd.f32 %v884, %v885
    %v887 = vrot.slane %v886, 1
    %v888 = vadd.f32 %v886, %v887
    %s889 = vtos %v888
    %v890 = vrcp.pop 72.0
    %s891 = vtos %v890
    %s892 = smul.f32 %s889, %s891
    %v893 = vstv %s892
    %v894 = vsub.f32 %v877, %v893
    %v895 = vmul.f32 %v894, %v894
    %v896 = vsel %vm751, %v895, 0.0
    %897 = vadd.xlane.f32.xlu0 %v896
    %v898 = vpop.xlane.xlu0 %897
    %v899 = vrot.slane %v898, 4
    %v900 = vadd.f32 %v898, %v899
    %v901 = vrot.slane %v900, 2
    %v902 = vadd.f32 %v900, %v901
    %v903 = vrot.slane %v902, 1
    %v904 = vadd.f32 %v902, %v903
    %s905 = vtos %v904
    %v906 = vrcp.pop 72.0
    %s907 = vtos %v906
    %s908 = smul.f32 %s905, %s907
    %s909 = sld [smem:[#allocation2 + $0x30]]
    %s910 = sadd.f32 %s908, 1e-05
    %v911 = vstv %s910
    %v912 = vrsqrt.pop %v911
    %s913 = vtos %v912
    %s914 = smul.f32 %s909, %s913
    %s915 = sld [smem:[#allocation2 + $0x32]]
    %s916 = smul.f32 %s892, %s914
    %s917 = ssub.f32 %s915, %s916
    %v918 = vstv %s914
    %v919 = vmul.f32 %v877, %v918
    %v920 = vstv %s917
    %v921 = vadd.f32 %v919, %v920
    %v922 = vmax.f32 %v921, 0.0
    %924 = vrot.lane.b32.xlu0 %v922, 36
    %v925 = vpop.permute.xlu0 %924
    %vm927 = vcmask 582944
    %928 = vst.msk [vmem:[#allocation7] sm:$0x3] %vm927, %v925
    // Predicated region
    $region26: #{cnn_buffer_forward.1} parent=1 // pred_check
      _
    $region27: #{cnn_buffer_forward.1} parent=1 // pred_check_branch
      %930 = sbr.rel (0) target = $region29
    $region28: #{cnn_buffer_forward.1} parent=1 // pred_region
      %s932 = ssub.s32 32, 32
      %933 = vsyncadd [#allocation4], %s932
      %s935 = sshll.u32 [#allocation7], 4
      %s936 = int_to_ptr.vmem [resolvable:$true] %s935
      %938 = dma.vmem_to_hbm [thread:$0]  %s936, 32, %s4, [#allocation4]
    $region29: #{cnn_buffer_forward.1} parent=1 // pred_fallthru
      _
    // Predicated region
    $region30: #{cnn_buffer_forward.1} parent=1 // pred_check
      _
    $region31: #{cnn_buffer_forward.1} parent=1 // pred_check_branch
      %940 = sbr.rel (0) target = $region33
    $region32: #{cnn_buffer_forward.1} parent=1 // pred_region
      %941 = dma.done [#allocation4], 32
    $region33: #{cnn_buffer_forward.1} parent=1 // pred_fallthru
      _
    %942 = vsyncpa [#allocation3], 1
    %943 = vsyncpa [#allocation4], 1
    %944 = vsyncpa [#allocation5], 1

</llo_original>
